<compile_context>
chip_gen: v5e
topology: v5e:2x2
jax: 0.10.0
libtpu: 0.0.40
codegen_flags: <defaults>
</compile_context>

<pallas_src>
import functools

import jax
import jax.numpy as jnp
from jax.experimental import pallas as pl
from jax.experimental.pallas import tpu as pltpu


HIDDEN_LAYERS = [512, 256, 128, 64]
LANE = 128            # TPU lane width
MXU_M = 256           # M granularity that saturates v6e/v7x's 256-wide MXU
BF16_TILE_ROWS = 16   # keep bf16 intermediates sublane-dense


def _round_up(x, m):
    return (x + m - 1) // m * m


def fc_kernel(x_ref,
              w0_ref, b0_ref,
              w1_ref, b1_ref,
              w2_ref, b2_ref,
              w3_ref, b3_ref,
              wo_ref, bo_ref,
              o_ref):
    """Fused MLP forward: 4x (Linear + ReLU [+ eval-mode dropout]) + output Linear.

    All matmuls run on the MXU with bf16 operands and f32 accumulation.  The
    whole parameter set (<1 MB in bf16) is VMEM-resident, so one grid step per
    batch tile performs the entire forward pass.
    """
    h = x_ref[...].astype(jnp.bfloat16)                 # single input cast
    for w_ref, b_ref in ((w0_ref, b0_ref),
                         (w1_ref, b1_ref),
                         (w2_ref, b2_ref),
                         (w3_ref, b3_ref)):
        z = jnp.dot(h, w_ref[...], preferred_element_type=jnp.float32)
        z = z + b_ref[...]                              # (1, out) broadcast, f32
        h = jnp.maximum(z, 0.0).astype(jnp.bfloat16)    # ReLU in f32, cast for MXU
        # nn.Dropout in eval mode == identity.
        # TODO(synk): training-mode dropout (pltpu.prng_random_bits mask).
    out = jnp.dot(h, wo_ref[...], preferred_element_type=jnp.float32)
    out = out + bo_ref[...]
    # Lane-dense (tile, 128) f32 store (unmasked vst); the HBM output array is
    # only (B, n_targets) wide, so the writeback DMA copies just the valid
    # columns (16 B/row instead of 512 B/row).
    o_ref[...] = out.astype(o_ref.dtype)


def _choose_tile(batch, batch_tile):
    """Batch-tile selection (perf-review items 1, 2, 6).

    * Tiny batches (<= 256 rows): a single tile rounded up to 16 rows.
    * Otherwise: at least two grid steps (v7x megacore sharding of the
      "parallel" batch axis), tile a multiple of 256 (full MXU M passes on
      v6e/v7x), capped at `batch_tile` to stay inside the VMEM budget.
    """
    b16 = _round_up(batch, BF16_TILE_ROWS)
    if b16 <= MXU_M:
        return b16
    return min(batch_tile, _round_up(pl.cdiv(batch, 2), MXU_M))


def fc_network_forward(x, params, *, n_targets, batch_tile=2048):
    """Run the fused Pallas MLP.

    x:       [B, n_features] float32
    params:  dict with w0..w3 / wo (bf16, lane-padded) and b0..b3 / bo (f32).
    Returns: [B, n_targets] float32
    """
    B, n_features = x.shape
    n_out_pad = params["wo"].shape[1]      # lane-padded output width (128)

    tile = _choose_tile(B, batch_tile)
    grid = (pl.cdiv(B, tile),)

    def full_block(arr):
        # Whole parameter tensor resident in VMEM.  Constant index_map =>
        # fetched once and the same block is revisited every grid step (no
        # per-step re-DMA); default buffering kept (double buffer of all
        # params is only ~0.9 MB).
        return pl.BlockSpec(arr.shape, lambda i: (0, 0))

    in_specs = [
        # n_features (32) deliberately left unpadded: padding x to 128 lanes
        # would 4x input DMA + add a wrapper pad pass for a tiny layer-0 win.
        pl.BlockSpec((tile, n_features), lambda i: (i, 0)),   # x tile
        full_block(params["w0"]), full_block(params["b0"]),
        full_block(params["w1"]), full_block(params["b1"]),
        full_block(params["w2"]), full_block(params["b2"]),
        full_block(params["w3"]), full_block(params["b3"]),
        full_block(params["wo"]), full_block(params["bo"]),
    ]
    # Output array is exactly (B, n_targets): no wrapper slice pass.  The
    # kernel block stays lane-padded to 128; Pallas masks the writeback DMA
    # to the valid columns/rows.
    out_spec = pl.BlockSpec((tile, n_out_pad), lambda i: (i, 0))

    return pl.pallas_call(
        fc_kernel,
        out_shape=jax.ShapeDtypeStruct((B, n_targets), jnp.float32),
        grid_spec=pltpu.PrefetchScalarGridSpec(
            num_scalar_prefetch=0,
            grid=grid,
            in_specs=in_specs,
            out_specs=out_spec,
        ),
        compiler_params=pltpu.CompilerParams(
            # Batch tiles are independent -> shard across TensorCores (v7x).
            dimension_semantics=("parallel",),
            # ~15 MB peak at tile=2048 (f32 z of the 512-wide layer dominates).
            # 32 MiB covers it with headroom on every generation: raises
            # v5e's 16 MiB scoped default, matches v6e/v7x defaults, and stays
            # well under v7x's 64 MiB physical VMEM.
            vmem_limit_bytes=32 * 1024 * 1024,
        ),
    )(x,
      params["w0"], params["b0"],
      params["w1"], params["b1"],
      params["w2"], params["b2"],
      params["w3"], params["b3"],
      params["wo"], params["bo"])


def init_params(key, n_features, n_targets, hidden_layers=HIDDEN_LAYERS):
    """Deterministic init mimicking nn.Linear (uniform +-1/sqrt(fan_in)).

    Hidden/output dims are zero-padded to multiples of 128 so activations are
    lane-dense and every MXU pass uses a full K; padded rows/cols/biases are
    zero, so results are numerically exact.  Weights are stored in bf16
    (MXU-native; fp8 on v7x would buy nothing at these sizes); biases stay f32.
    """
    params = {}
    sizes = [n_features] + list(hidden_layers)
    padded = [n_features] + [_round_up(h, LANE) for h in hidden_layers]
    keys = jax.random.split(key, 2 * (len(hidden_layers) + 1))
    ki = 0
    for li, (d_in, d_out) in enumerate(zip(sizes[:-1], sizes[1:])):
        p_in, p_out = padded[li], padded[li + 1]
        bound = 1.0 / jnp.sqrt(d_in)
        w = jax.random.uniform(keys[ki], (d_in, d_out), jnp.float32,
                               -bound, bound); ki += 1
        b = jax.random.uniform(keys[ki], (1, d_out), jnp.float32,
                               -bound, bound); ki += 1
        w_pad = jnp.zeros((p_in, p_out), jnp.float32).at[:d_in, :d_out].set(w)
        b_pad = jnp.zeros((1, p_out), jnp.float32).at[:, :d_out].set(b)
        params[f"w{li}"] = w_pad.astype(jnp.bfloat16)
        params[f"b{li}"] = b_pad

    # Output layer, lane-padded to a multiple of 128 (lane-dense in-kernel store).
    d_in = hidden_layers[-1]
    p_in = padded[-1]
    n_targets_pad = _round_up(max(n_targets, 1), LANE)
    bound = 1.0 / jnp.sqrt(d_in)
    wo = jax.random.uniform(keys[ki], (d_in, n_targets), jnp.float32,
                            -bound, bound); ki += 1
    bo = jax.random.uniform(keys[ki], (1, n_targets), jnp.float32,
                            -bound, bound); ki += 1
    wo_pad = jnp.zeros((p_in, n_targets_pad), jnp.float32).at[:d_in, :n_targets].set(wo)
    bo_pad = jnp.zeros((1, n_targets_pad), jnp.float32).at[:, :n_targets].set(bo)
    params["wo"] = wo_pad.astype(jnp.bfloat16)
    params["bo"] = bo_pad
    return params


def reference_forward(x, params, n_targets):
    """Pure-JAX reference with the same bf16-operand / f32-accumulate math."""
    h = x
    for li in range(len(HIDDEN_LAYERS)):
        z = jnp.dot(h.astype(jnp.bfloat16), params[f"w{li}"],
                    preferred_element_type=jnp.float32) + params[f"b{li}"]
        h = jnp.maximum(z, 0.0)
    out = jnp.dot(h.astype(jnp.bfloat16), params["wo"],
                  preferred_element_type=jnp.float32) + params["bo"]
    return out[:, :n_targets]


if __name__ == "__main__":
    n_features = 32
    n_targets = 4

    key = jax.random.PRNGKey(0)
    k_x, k_x2, k_p = jax.random.split(key, 3)
    params = init_params(k_p, n_features, n_targets)

    fwd = jax.jit(functools.partial(fc_network_forward, n_targets=n_targets))

    # Tiny batch: single (16-row) tile, exercises partial-row masking.
    x = jax.random.normal(k_x, (8, n_features), jnp.float32)
    out = jax.block_until_ready(fwd(x, params))
    ref = reference_forward(x, params, n_targets)
    assert out.shape == (8, n_targets), out.shape
    assert jnp.allclose(out, ref, atol=1e-3, rtol=1e-3), "mismatch vs reference (B=8)"

    # Moderate batch: two 256-row grid steps (v7x megacore path) with a
    # partial last tile and column-masked output writeback.
    x2 = jax.random.normal(k_x2, (300, n_features), jnp.float32)
    out2 = jax.block_until_ready(fwd(x2, params))
    ref2 = reference_forward(x2, params, n_targets)
    assert out2.shape == (300, n_targets), out2.shape
    assert jnp.allclose(out2, ref2, atol=1e-3, rtol=1e-3), "mismatch vs reference (B=300)"

    print("KERNEL_OK")
</pallas_src>

<mosaic_0001>
module attributes {stable_mosaic.version = 11 : i64} {
  func.func @fc_kernel(%arg0: i32, %arg1: memref<16x32xf32, #tpu.memory_space<vmem>>, %arg2: memref<32x512xbf16, #tpu.memory_space<vmem>>, %arg3: memref<1x512xf32, #tpu.memory_space<vmem>>, %arg4: memref<512x256xbf16, #tpu.memory_space<vmem>>, %arg5: memref<1x256xf32, #tpu.memory_space<vmem>>, %arg6: memref<256x128xbf16, #tpu.memory_space<vmem>>, %arg7: memref<1x128xf32, #tpu.memory_space<vmem>>, %arg8: memref<128x128xbf16, #tpu.memory_space<vmem>>, %arg9: memref<1x128xf32, #tpu.memory_space<vmem>>, %arg10: memref<128x128xbf16, #tpu.memory_space<vmem>>, %arg11: memref<1x128xf32, #tpu.memory_space<vmem>>, %arg12: memref<16x128xf32, #tpu.memory_space<vmem>>) attributes {dimension_semantics = [#tpu.dimension_semantics<parallel>], iteration_bounds = array<i64: 1>, scalar_prefetch = 0 : i64, scratch_operands = 0 : i64, tpu.core_type = #tpu.core_type<tc>, window_params = [{transform_indices = @transform_0, window_bounds = array<i64: 16, 32>}, {pipeline_mode = #tpu.pipeline_mode<synchronous>, transform_indices = @transform_1, window_bounds = array<i64: 32, 512>}, {pipeline_mode = #tpu.pipeline_mode<synchronous>, transform_indices = @transform_2, window_bounds = array<i64: 1, 512>}, {pipeline_mode = #tpu.pipeline_mode<synchronous>, transform_indices = @transform_3, window_bounds = array<i64: 512, 256>}, {pipeline_mode = #tpu.pipeline_mode<synchronous>, transform_indices = @transform_4, window_bounds = array<i64: 1, 256>}, {pipeline_mode = #tpu.pipeline_mode<synchronous>, transform_indices = @transform_5, window_bounds = array<i64: 256, 128>}, {pipeline_mode = #tpu.pipeline_mode<synchronous>, transform_indices = @transform_6, window_bounds = array<i64: 1, 128>}, {pipeline_mode = #tpu.pipeline_mode<synchronous>, transform_indices = @transform_7, window_bounds = array<i64: 128, 128>}, {pipeline_mode = #tpu.pipeline_mode<synchronous>, transform_indices = @transform_8, window_bounds = array<i64: 1, 128>}, {pipeline_mode = #tpu.pipeline_mode<synchronous>, transform_indices = @transform_9, window_bounds = array<i64: 128, 128>}, {pipeline_mode = #tpu.pipeline_mode<synchronous>, transform_indices = @transform_10, window_bounds = array<i64: 1, 128>}, {transform_indices = @transform_11, window_bounds = array<i64: 16, 128>}]} {
    %c0 = arith.constant 0 : index
    %c0_0 = arith.constant 0 : index
    %0 = vector.load %arg1[%c0, %c0_0] : memref<16x32xf32, #tpu.memory_space<vmem>>, vector<16x32xf32>
    %1 = arith.truncf %0 : vector<16x32xf32> to vector<16x32xbf16>
    %c0_1 = arith.constant 0 : index
    %c0_2 = arith.constant 0 : index
    %2 = vector.load %arg2[%c0_1, %c0_2] : memref<32x512xbf16, #tpu.memory_space<vmem>>, vector<32x512xbf16>
    %cst = arith.constant dense<0.000000e+00> : vector<16x512xf32>
    %3 = tpu.matmul %1, %2, %cst {dimension_numbers = #tpu.dot_dimension_numbers<[1], [0], [0], [1], [0, 0, 1, 1], [], []>} : vector<16x32xbf16>, vector<32x512xbf16>, vector<16x512xf32> -> vector<16x512xf32>
    %c0_3 = arith.constant 0 : index
    %c0_4 = arith.constant 0 : index
    %4 = vector.load %arg3[%c0_3, %c0_4] : memref<1x512xf32, #tpu.memory_space<vmem>>, vector<1x512xf32>
    %5 = vector.broadcast %4 : vector<1x512xf32> to vector<16x512xf32>
    %6 = arith.addf %3, %5 : vector<16x512xf32>
    %cst_5 = arith.constant 0.000000e+00 : f32
    %7 = vector.broadcast %cst_5 : f32 to vector<16x512xf32>
    %8 = arith.maximumf %6, %7 : vector<16x512xf32>
    %9 = arith.truncf %8 : vector<16x512xf32> to vector<16x512xbf16>
    %c0_6 = arith.constant 0 : index
    %c0_7 = arith.constant 0 : index
    %10 = vector.load %arg4[%c0_6, %c0_7] : memref<512x256xbf16, #tpu.memory_space<vmem>>, vector<512x256xbf16>
    %cst_8 = arith.constant dense<0.000000e+00> : vector<16x256xf32>
    %11 = tpu.matmul %9, %10, %cst_8 {dimension_numbers = #tpu.dot_dimension_numbers<[1], [0], [0], [1], [0, 0, 1, 1], [], []>} : vector<16x512xbf16>, vector<512x256xbf16>, vector<16x256xf32> -> vector<16x256xf32>
    %c0_9 = arith.constant 0 : index
    %c0_10 = arith.constant 0 : index
    %12 = vector.load %arg5[%c0_9, %c0_10] : memref<1x256xf32, #tpu.memory_space<vmem>>, vector<1x256xf32>
    %13 = vector.broadcast %12 : vector<1x256xf32> to vector<16x256xf32>
    %14 = arith.addf %11, %13 : vector<16x256xf32>
    %cst_11 = arith.constant 0.000000e+00 : f32
    %15 = vector.broadcast %cst_11 : f32 to vector<16x256xf32>
    %16 = arith.maximumf %14, %15 : vector<16x256xf32>
    %17 = arith.truncf %16 : vector<16x256xf32> to vector<16x256xbf16>
    %c0_12 = arith.constant 0 : index
    %c0_13 = arith.constant 0 : index
    %18 = vector.load %arg6[%c0_12, %c0_13] : memref<256x128xbf16, #tpu.memory_space<vmem>>, vector<256x128xbf16>
    %cst_14 = arith.constant dense<0.000000e+00> : vector<16x128xf32>
    %19 = tpu.matmul %17, %18, %cst_14 {dimension_numbers = #tpu.dot_dimension_numbers<[1], [0], [0], [1], [0, 0, 1, 1], [], []>} : vector<16x256xbf16>, vector<256x128xbf16>, vector<16x128xf32> -> vector<16x128xf32>
    %c0_15 = arith.constant 0 : index
    %c0_16 = arith.constant 0 : index
    %20 = vector.load %arg7[%c0_15, %c0_16] : memref<1x128xf32, #tpu.memory_space<vmem>>, vector<1x128xf32>
    %21 = vector.broadcast %20 : vector<1x128xf32> to vector<16x128xf32>
    %22 = arith.addf %19, %21 : vector<16x128xf32>
    %cst_17 = arith.constant 0.000000e+00 : f32
    %23 = vector.broadcast %cst_17 : f32 to vector<16x128xf32>
    %24 = arith.maximumf %22, %23 : vector<16x128xf32>
    %25 = arith.truncf %24 : vector<16x128xf32> to vector<16x128xbf16>
    %c0_18 = arith.constant 0 : index
    %c0_19 = arith.constant 0 : index
    %26 = vector.load %arg8[%c0_18, %c0_19] : memref<128x128xbf16, #tpu.memory_space<vmem>>, vector<128x128xbf16>
    %cst_20 = arith.constant dense<0.000000e+00> : vector<16x128xf32>
    %27 = tpu.matmul %25, %26, %cst_20 {dimension_numbers = #tpu.dot_dimension_numbers<[1], [0], [0], [1], [0, 0, 1, 1], [], []>} : vector<16x128xbf16>, vector<128x128xbf16>, vector<16x128xf32> -> vector<16x128xf32>
    %c0_21 = arith.constant 0 : index
    %c0_22 = arith.constant 0 : index
    %28 = vector.load %arg9[%c0_21, %c0_22] : memref<1x128xf32, #tpu.memory_space<vmem>>, vector<1x128xf32>
    %29 = vector.broadcast %28 : vector<1x128xf32> to vector<16x128xf32>
    %30 = arith.addf %27, %29 : vector<16x128xf32>
    %cst_23 = arith.constant 0.000000e+00 : f32
    %31 = vector.broadcast %cst_23 : f32 to vector<16x128xf32>
    %32 = arith.maximumf %30, %31 : vector<16x128xf32>
    %33 = arith.truncf %32 : vector<16x128xf32> to vector<16x128xbf16>
    %c0_24 = arith.constant 0 : index
    %c0_25 = arith.constant 0 : index
    %34 = vector.load %arg10[%c0_24, %c0_25] : memref<128x128xbf16, #tpu.memory_space<vmem>>, vector<128x128xbf16>
    %cst_26 = arith.constant dense<0.000000e+00> : vector<16x128xf32>
    %35 = tpu.matmul %33, %34, %cst_26 {dimension_numbers = #tpu.dot_dimension_numbers<[1], [0], [0], [1], [0, 0, 1, 1], [], []>} : vector<16x128xbf16>, vector<128x128xbf16>, vector<16x128xf32> -> vector<16x128xf32>
    %c0_27 = arith.constant 0 : index
    %c0_28 = arith.constant 0 : index
    %36 = vector.load %arg11[%c0_27, %c0_28] : memref<1x128xf32, #tpu.memory_space<vmem>>, vector<1x128xf32>
    %37 = vector.broadcast %36 : vector<1x128xf32> to vector<16x128xf32>
    %38 = arith.addf %35, %37 : vector<16x128xf32>
    %c0_29 = arith.constant 0 : index
    %c0_30 = arith.constant 0 : index
    %39 = vector.load %arg12[%c0_29, %c0_30] : memref<16x128xf32, #tpu.memory_space<vmem>>, vector<16x128xf32>
    tpu.vector_store %arg12[%c0_29, %c0_30], %38 {strides = array<i32>} : memref<16x128xf32, #tpu.memory_space<vmem>>, vector<16x128xf32>,
    return
  }
  func.func @transform_0(%arg0: i32) -> (i32, i32) {
    %c0_i32 = arith.constant 0 : i32
    %c0_i32_0 = arith.constant 0 : i32
    return %arg0, %c0_i32 : i32, i32
  }
  func.func @transform_1(%arg0: i32) -> (i32, i32) {
    %c0_i32 = arith.constant 0 : i32
    %c0_i32_0 = arith.constant 0 : i32
    %c0_i32_1 = arith.constant 0 : i32
    return %c0_i32, %c0_i32_0 : i32, i32
  }
  func.func @transform_2(%arg0: i32) -> (i32, i32) {
    %c0_i32 = arith.constant 0 : i32
    %c0_i32_0 = arith.constant 0 : i32
    %c0_i32_1 = arith.constant 0 : i32
    return %c0_i32, %c0_i32_0 : i32, i32
  }
  func.func @transform_3(%arg0: i32) -> (i32, i32) {
    %c0_i32 = arith.constant 0 : i32
    %c0_i32_0 = arith.constant 0 : i32
    %c0_i32_1 = arith.constant 0 : i32
    return %c0_i32, %c0_i32_0 : i32, i32
  }
  func.func @transform_4(%arg0: i32) -> (i32, i32) {
    %c0_i32 = arith.constant 0 : i32
    %c0_i32_0 = arith.constant 0 : i32
    %c0_i32_1 = arith.constant 0 : i32
    return %c0_i32, %c0_i32_0 : i32, i32
  }
  func.func @transform_5(%arg0: i32) -> (i32, i32) {
    %c0_i32 = arith.constant 0 : i32
    %c0_i32_0 = arith.constant 0 : i32
    %c0_i32_1 = arith.constant 0 : i32
    return %c0_i32, %c0_i32_0 : i32, i32
  }
  func.func @transform_6(%arg0: i32) -> (i32, i32) {
    %c0_i32 = arith.constant 0 : i32
    %c0_i32_0 = arith.constant 0 : i32
    %c0_i32_1 = arith.constant 0 : i32
    return %c0_i32, %c0_i32_0 : i32, i32
  }
  func.func @transform_7(%arg0: i32) -> (i32, i32) {
    %c0_i32 = arith.constant 0 : i32
    %c0_i32_0 = arith.constant 0 : i32
    %c0_i32_1 = arith.constant 0 : i32
    return %c0_i32, %c0_i32_0 : i32, i32
  }
  func.func @transform_8(%arg0: i32) -> (i32, i32) {
    %c0_i32 = arith.constant 0 : i32
    %c0_i32_0 = arith.constant 0 : i32
    %c0_i32_1 = arith.constant 0 : i32
    return %c0_i32, %c0_i32_0 : i32, i32
  }
  func.func @transform_9(%arg0: i32) -> (i32, i32) {
    %c0_i32 = arith.constant 0 : i32
    %c0_i32_0 = arith.constant 0 : i32
    %c0_i32_1 = arith.constant 0 : i32
    return %c0_i32, %c0_i32_0 : i32, i32
  }
  func.func @transform_10(%arg0: i32) -> (i32, i32) {
    %c0_i32 = arith.constant 0 : i32
    %c0_i32_0 = arith.constant 0 : i32
    %c0_i32_1 = arith.constant 0 : i32
    return %c0_i32, %c0_i32_0 : i32, i32
  }
  func.func @transform_11(%arg0: i32) -> (i32, i32) {
    %c0_i32 = arith.constant 0 : i32
    %c0_i32_0 = arith.constant 0 : i32
    return %arg0, %c0_i32 : i32, i32
  }
}

</mosaic_0001>

<llo_original>
// kernel: fc_network_forward.1
$region0: #{fc_network_forward.1}
  #allocation0 [shape = 'u32[]', space=smem, size = 0x4, offset = 0x4, fixed_abs, tag = 'smem constant byte address 0x4 - core index']
  #allocation1 [shape = 'u32[72,128]{1,0:T(1,128)}', space=vmem, size = 0x9000, scoped, tag = 'internal scratch']
  %s0 = inlined_call_operand.hbm [shape: f32[8,32], index: 0, kind: input, shape index: {}]
  %s1 = inlined_call_operand.hbm [shape: bf16[32,512], index: 1, kind: input, shape index: {}]
  %s2 = inlined_call_operand.hbm [shape: f32[1,512], index: 2, kind: input, shape index: {}]
  %s3 = inlined_call_operand.hbm [shape: bf16[512,256], index: 3, kind: input, shape index: {}]
  %s4 = inlined_call_operand.hbm [shape: f32[1,256], index: 4, kind: input, shape index: {}]
  %s5 = inlined_call_operand.hbm [shape: bf16[256,128], index: 5, kind: input, shape index: {}]
  %s6 = inlined_call_operand.vmem [shape: f32[1,128], index: 6, kind: input, shape index: {}]
  %s7 = inlined_call_operand.hbm [shape: bf16[128,128], index: 7, kind: input, shape index: {}]
  %s8 = inlined_call_operand.vmem [shape: f32[1,128], index: 8, kind: input, shape index: {}]
  %s9 = inlined_call_operand.hbm [shape: bf16[128,128], index: 9, kind: input, shape index: {}]
  %s10 = inlined_call_operand.vmem [shape: f32[1,128], index: 10, kind: input, shape index: {}]
  %s11 = inlined_call_operand.vmem [shape: f32[8,4], index: 11, kind: output, shape index: {}]
  %s12 = sld [smem:[#allocation0]]
  $region120: #{fc_network_forward.1} parent=0
    _
  %s14 = ssub.s32 1, %s12
  %s15 = scalar_select 0, %s14, %s12
  $region1: #{fc_network_forward.1} parent=0
    #allocation2 [shape = 'u8[8192]{0}', space=vmem, size = 0x2000, scoped, tag = 'input window, operand 0, single buffered']
    #allocation3 [shape = 's32[1]{0}', space=sflag, size = 0x4, scoped, tag = 'scoped memory for fc_network_forward.1']
    #allocation4 [shape = 'u8[32768]{0}', space=vmem, size = 0x8000, scoped, tag = 'input window, operand 1, single buffered']
    #allocation5 [shape = 's32[1]{0}', space=sflag, size = 0x4, scoped, tag = 'scoped memory for fc_network_forward.1']
    #allocation6 [shape = 'u8[2048]{0}', space=vmem, size = 0x800, scoped, tag = 'input window, operand 2, single buffered']
    #allocation7 [shape = 'u8[262144]{0}', space=vmem, size = 0x40000, scoped, tag = 'input window, operand 3, single buffered']
    #allocation8 [shape = 's32[1]{0}', space=sflag, size = 0x4, scoped, tag = 'scoped memory for fc_network_forward.1']
    #allocation9 [shape = 'u8[1024]{0}', space=vmem, size = 0x400, scoped, tag = 'input window, operand 4, single buffered']
    #allocation10 [shape = 'u8[65536]{0}', space=vmem, size = 0x10000, scoped, tag = 'input window, operand 5, single buffered']
    #allocation11 [shape = 's32[1]{0}', space=sflag, size = 0x4, scoped, tag = 'scoped memory for fc_network_forward.1']
    #allocation12 [shape = 'u8[32768]{0}', space=vmem, size = 0x8000, scoped, tag = 'input window, operand 7, single buffered']
    #allocation13 [shape = 'u8[32768]{0}', space=vmem, size = 0x8000, scoped, tag = 'input window, operand 9, single buffered']
    #allocation14 [shape = 's32[1]{0}', space=sflag, size = 0x4, scoped, tag = 'scoped memory for fc_network_forward.1']
    #allocation15 [shape = 'u8[8192]{0}', space=vmem, size = 0x2000, scoped, tag = 'output window, operand 0, single buffered']
    %16 = vsyncpa [#allocation3], 0
    %17 = vsyncpa [#allocation5], 0
    %18 = vsyncpa [#allocation8], 0
    %19 = vsyncpa [#allocation11], 0
    %20 = vsyncpa [#allocation14], 0
    // Predicated region
    $region2: #{fc_network_forward.1} parent=1 // pred_check
      _
    $region3: #{fc_network_forward.1} parent=1 // pred_check_branch
      %22 = sbr.rel (0) target = $region5
    $region4: #{fc_network_forward.1} parent=1 // pred_region
      %24 = vsyncadd [#allocation3], 128
      %s25 = sshll.u32 %s0, 4
      %s26 = int_to_ptr.hbm [resolvable:$true] %s25
      %s27 = sshll.u32 [#allocation2], 4
      %s28 = int_to_ptr.vmem [resolvable:$true] %s27
      %33 = dma.hbm_to_vmem [thread:$0]  %s26, 128, %s28, [#allocation3], 128, 128, 8
    $region5: #{fc_network_forward.1} parent=1 // pred_fallthru
      _
    // Predicated region
    $region6: #{fc_network_forward.1} parent=1 // pred_check
      _
    $region7: #{fc_network_forward.1} parent=1 // pred_check_branch
      %35 = sbr.rel (0) target = $region9
    $region8: #{fc_network_forward.1} parent=1 // pred_region
      %37 = vsyncadd [#allocation5], 0
      %s38 = sshll.u32 %s1, 4
      %s39 = int_to_ptr.hbm [resolvable:$true] %s38
      %s40 = sshll.u32 [#allocation4], 4
      %s41 = int_to_ptr.vmem [resolvable:$true] %s40
      %46 = dma.hbm_to_vmem [thread:$0]  %s39, 1024, %s41, [#allocation5], 256, 256, 16
    $region9: #{fc_network_forward.1} parent=1 // pred_fallthru
      _
    // Predicated region
    $region10: #{fc_network_forward.1} parent=1 // pred_check
      _
    $region11: #{fc_network_forward.1} parent=1 // pred_check_branch
      %48 = sbr.rel (0) target = $region13
    $region12: #{fc_network_forward.1} parent=1 // pred_region
      %50 = vsyncadd [#allocation5], 0
      %s52 = sshll.u32 %s2, 4
      %s53 = int_to_ptr.hbm [resolvable:$true] %s52
      %s54 = sshll.u32 [#allocation6], 4
      %s55 = int_to_ptr.vmem [resolvable:$true] %s54
      %57 = dma.hbm_to_vmem [thread:$0]  %s53, 64, %s55, [#allocation5]
    $region13: #{fc_network_forward.1} parent=1 // pred_fallthru
      _
    // Predicated region
    $region14: #{fc_network_forward.1} parent=1 // pred_check
      _
    $region15: #{fc_network_forward.1} parent=1 // pred_check_branch
      %59 = sbr.rel (0) target = $region17
    $region16: #{fc_network_forward.1} parent=1 // pred_region
      %61 = vsyncadd [#allocation8], 0
      %s62 = sshll.u32 %s3, 4
      %s63 = int_to_ptr.hbm [resolvable:$true] %s62
      %s64 = sshll.u32 [#allocation7], 4
      %s65 = int_to_ptr.vmem [resolvable:$true] %s64
      %70 = dma.hbm_to_vmem [thread:$0]  %s63, 8192, %s65, [#allocation8], 128, 128, 8
    $region17: #{fc_network_forward.1} parent=1 // pred_fallthru
      _
    // Predicated region
    $region18: #{fc_network_forward.1} parent=1 // pred_check
      _
    $region19: #{fc_network_forward.1} parent=1 // pred_check_branch
      %72 = sbr.rel (0) target = $region21
    $region20: #{fc_network_forward.1} parent=1 // pred_region
      %74 = vsyncadd [#allocation8], 0
      %s76 = sshll.u32 %s4, 4
      %s77 = int_to_ptr.hbm [resolvable:$true] %s76
      %s78 = sshll.u32 [#allocation9], 4
      %s79 = int_to_ptr.vmem [resolvable:$true] %s78
      %81 = dma.hbm_to_vmem [thread:$0]  %s77, 32, %s79, [#allocation8]
    $region21: #{fc_network_forward.1} parent=1 // pred_fallthru
      _
    // Predicated region
    $region22: #{fc_network_forward.1} parent=1 // pred_check
      _
    $region23: #{fc_network_forward.1} parent=1 // pred_check_branch
      %83 = sbr.rel (0) target = $region25
    $region24: #{fc_network_forward.1} parent=1 // pred_region
      %85 = vsyncadd [#allocation11], 0
      %s86 = sshll.u32 %s5, 4
      %s87 = int_to_ptr.hbm [resolvable:$true] %s86
      %s88 = sshll.u32 [#allocation10], 4
      %s89 = int_to_ptr.vmem [resolvable:$true] %s88
      %94 = dma.hbm_to_vmem [thread:$0]  %s87, 2048, %s89, [#allocation11], 64, 64, 4
    $region25: #{fc_network_forward.1} parent=1 // pred_fallthru
      _
    // Predicated region
    $region26: #{fc_network_forward.1} parent=1 // pred_check
      _
    $region27: #{fc_network_forward.1} parent=1 // pred_check_branch
      %96 = sbr.rel (0) target = $region29
    $region28: #{fc_network_forward.1} parent=1 // pred_region
      _
    $region29: #{fc_network_forward.1} parent=1 // pred_fallthru
      _
    // Predicated region
    $region30: #{fc_network_forward.1} parent=1 // pred_check
      _
    $region31: #{fc_network_forward.1} parent=1 // pred_check_branch
      %98 = sbr.rel (0) target = $region33
    $region32: #{fc_network_forward.1} parent=1 // pred_region
      %100 = vsyncadd [#allocation11], 0
      %s101 = sshll.u32 %s7, 4
      %s102 = int_to_ptr.hbm [resolvable:$true] %s101
      %s103 = sshll.u32 [#allocation12], 4
      %s104 = int_to_ptr.vmem [resolvable:$true] %s103
      %109 = dma.hbm_to_vmem [thread:$0]  %s102, 1024, %s104, [#allocation11], 64, 64, 4
    $region33: #{fc_network_forward.1} parent=1 // pred_fallthru
      _
    // Predicated region
    $region34: #{fc_network_forward.1} parent=1 // pred_check
      _
    $region35: #{fc_network_forward.1} parent=1 // pred_check_branch
      %111 = sbr.rel (0) target = $region37
    $region36: #{fc_network_forward.1} parent=1 // pred_region
      _
    $region37: #{fc_network_forward.1} parent=1 // pred_fallthru
      _
    // Predicated region
    $region38: #{fc_network_forward.1} parent=1 // pred_check
      _
    $region39: #{fc_network_forward.1} parent=1 // pred_check_branch
      %113 = sbr.rel (0) target = $region41
    $region40: #{fc_network_forward.1} parent=1 // pred_region
      %115 = vsyncadd [#allocation14], 0
      %s116 = sshll.u32 %s9, 4
      %s117 = int_to_ptr.hbm [resolvable:$true] %s116
      %s118 = sshll.u32 [#allocation13], 4
      %s119 = int_to_ptr.vmem [resolvable:$true] %s118
      %124 = dma.hbm_to_vmem [thread:$0]  %s117, 1024, %s119, [#allocation14], 64, 64, 4
    $region41: #{fc_network_forward.1} parent=1 // pred_fallthru
      _
    // Predicated region
    $region42: #{fc_network_forward.1} parent=1 // pred_check
      _
    $region43: #{fc_network_forward.1} parent=1 // pred_check_branch
      %126 = sbr.rel (0) target = $region45
    $region44: #{fc_network_forward.1} parent=1 // pred_region
      _
    $region45: #{fc_network_forward.1} parent=1 // pred_fallthru
      _
    // Predicated region
    $region46: #{fc_network_forward.1} parent=1 // pred_check
      _
    $region47: #{fc_network_forward.1} parent=1 // pred_check_branch
      %128 = sbr.rel (0) target = $region49
    $region48: #{fc_network_forward.1} parent=1 // pred_region
      %130 = dma.done [#allocation3], 256
    $region49: #{fc_network_forward.1} parent=1 // pred_fallthru
      _
    // Predicated region
    $region50: #{fc_network_forward.1} parent=1 // pred_check
      _
    $region51: #{fc_network_forward.1} parent=1 // pred_check_branch
      %132 = sbr.rel (0) target = $region53
    $region52: #{fc_network_forward.1} parent=1 // pred_region
      %134 = dma.done [#allocation5], 1024
    $region53: #{fc_network_forward.1} parent=1 // pred_fallthru
      _
    // Predicated region
    $region54: #{fc_network_forward.1} parent=1 // pred_check
      _
    $region55: #{fc_network_forward.1} parent=1 // pred_check_branch
      %136 = sbr.rel (0) target = $region57
    $region56: #{fc_network_forward.1} parent=1 // pred_region
      %138 = dma.done [#allocation5], 64
    $region57: #{fc_network_forward.1} parent=1 // pred_fallthru
      _
    // Predicated region
    $region58: #{fc_network_forward.1} parent=1 // pred_check
      _
    $region59: #{fc_network_forward.1} parent=1 // pred_check_branch
      %140 = sbr.rel (0) target = $region61
    $region60: #{fc_network_forward.1} parent=1 // pred_region
      %142 = dma.done [#allocation8], 8192
    $region61: #{fc_network_forward.1} parent=1 // pred_fallthru
      _
    // Predicated region
    $region62: #{fc_network_forward.1} parent=1 // pred_check
      _
    $region63: #{fc_network_forward.1} parent=1 // pred_check_branch
      %144 = sbr.rel (0) target = $region65
    $region64: #{fc_network_forward.1} parent=1 // pred_region
      %146 = dma.done [#allocation8], 32
    $region65: #{fc_network_forward.1} parent=1 // pred_fallthru
      _
    // Predicated region
    $region66: #{fc_network_forward.1} parent=1 // pred_check
      _
    $region67: #{fc_network_forward.1} parent=1 // pred_check_branch
      %148 = sbr.rel (0) target = $region69
    $region68: #{fc_network_forward.1} parent=1 // pred_region
      %150 = dma.done [#allocation11], 2048
    $region69: #{fc_network_forward.1} parent=1 // pred_fallthru
      _
    // Predicated region
    $region70: #{fc_network_forward.1} parent=1 // pred_check
      _
    $region71: #{fc_network_forward.1} parent=1 // pred_check_branch
      %152 = sbr.rel (0) target = $region73
    $region72: #{fc_network_forward.1} parent=1 // pred_region
      %154 = dma.done [#allocation11], 1024
    $region73: #{fc_network_forward.1} parent=1 // pred_fallthru
      _
    // Predicated region
    $region74: #{fc_network_forward.1} parent=1 // pred_check
      _
    $region75: #{fc_network_forward.1} parent=1 // pred_check_branch
      %156 = sbr.rel (0) target = $region77
    $region76: #{fc_network_forward.1} parent=1 // pred_region
      %158 = dma.done [#allocation14], 1024
    $region77: #{fc_network_forward.1} parent=1 // pred_fallthru
      _
    %v160 = vld [vmem:[#allocation2] sm:$0xff]
    %v161 = vld [vmem:[#allocation2 + $0x8] sm:$0xff]
    %v162 = vpack.c.bf16 %v161, %v160
    %v163 = vld [vmem:[#allocation4] sm:$0xff]
    %v164 = vld [vmem:[#allocation4 + $0x8] sm:$0xff]
    %v165 = vld [vmem:[#allocation4 + $0x10] sm:$0xff]
    %v166 = vld [vmem:[#allocation4 + $0x18] sm:$0xff]
    %v167 = vld [vmem:[#allocation4 + $0x20] sm:$0xff]
    %v168 = vld [vmem:[#allocation4 + $0x28] sm:$0xff]
    %v169 = vld [vmem:[#allocation4 + $0x30] sm:$0xff]
    %v170 = vld [vmem:[#allocation4 + $0x38] sm:$0xff]
    %v171 = vld [vmem:[#allocation6] sm:$0xf]
    %v173 = vperm.slane %v171, 0
    %v174 = vperm.slane %v171, 1
    %v175 = vperm.slane %v171, 2
    %v176 = vperm.slane %v171, 3
    %v189 = vunpack.c.l.b16 %v163
    %v190 = vunpack.c.h.b16 %v163
    %v191 = vunpack.c.l.b16 %v164
    %v192 = vunpack.c.h.b16 %v164
    %v193 = vunpack.c.l.b16 %v165
    %v194 = vunpack.c.h.b16 %v165
    %v195 = vunpack.c.l.b16 %v166
    %v196 = vunpack.c.h.b16 %v166
    %v197 = vunpack.c.l.b16 %v167
    %v198 = vunpack.c.h.b16 %v167
    %v199 = vunpack.c.l.b16 %v168
    %v200 = vunpack.c.h.b16 %v168
    %v201 = vunpack.c.l.b16 %v169
    %v202 = vunpack.c.h.b16 %v169
    %v203 = vunpack.c.l.b16 %v170
    %v204 = vunpack.c.h.b16 %v170
    %v205 = vpack.c.b16 %v193, %v189
    %v206 = vpack.c.b16 %v194, %v190
    %v207 = vpack.c.b16 %v195, %v191
    %v208 = vpack.c.b16 %v196, %v192
    %v209 = vpack.c.b16 %v201, %v197
    %v210 = vpack.c.b16 %v202, %v198
    %v211 = vpack.c.b16 %v203, %v199
    %v212 = vpack.c.b16 %v204, %v200
    %vm221 = vcmask 261120
    %v223 = vsel %vm221, %v162, 0
    %225 = vmatpush.bf16.msra.mxu0 0
    %226 = vmatpush.bf16.msra.mxu0 0
    %227 = vmatpush.bf16.msra.mxu0 0
    %228 = vmatpush.bf16.msra.mxu0 0
    %229 = vmatpush.bf16.msra.mxu0 0
    %230 = vmatpush.bf16.msra.mxu0 0
    %231 = vmatpush.bf16.msra.mxu0 %v209
    %232 = vmatpush.bf16.msra.mxu0 %v205
    %233 = vmatmul.bf16.gmra.mxu0 %v223
    %v234 = vpop.f32.mrf.mxu0
    %v235 = vadd.f32 %v173, %v234
    %v236 = vpop.f32.mrf.mxu0
    %v237 = vadd.f32 %v173, %v236
    %238 = vdwg.mxu0
    %239 = vmatpush.bf16.msra.mxu0 0
    %240 = vmatpush.bf16.msra.mxu0 0
    %241 = vmatpush.bf16.msra.mxu0 0
    %242 = vmatpush.bf16.msra.mxu0 0
    %243 = vmatpush.bf16.msra.mxu0 0
    %244 = vmatpush.bf16.msra.mxu0 0
    %245 = vmatpush.bf16.msra.mxu0 %v210
    %246 = vmatpush.bf16.msra.mxu0 %v206
    %247 = vmatmul.bf16.gmra.mxu0 %v223
    %v248 = vpop.f32.mrf.mxu0
    %v249 = vadd.f32 %v174, %v248
    %v250 = vpop.f32.mrf.mxu0
    %v251 = vadd.f32 %v174, %v250
    %252 = vdwg.mxu0
    %253 = vmatpush.bf16.msra.mxu0 0
    %254 = vmatpush.bf16.msra.mxu0 0
    %255 = vmatpush.bf16.msra.mxu0 0
    %256 = vmatpush.bf16.msra.mxu0 0
    %257 = vmatpush.bf16.msra.mxu0 0
    %258 = vmatpush.bf16.msra.mxu0 0
    %259 = vmatpush.bf16.msra.mxu0 %v211
    %260 = vmatpush.bf16.msra.mxu0 %v207
    %261 = vmatmul.bf16.gmra.mxu0 %v223
    %v262 = vpop.f32.mrf.mxu0
    %v263 = vadd.f32 %v175, %v262
    %v264 = vpop.f32.mrf.mxu0
    %v265 = vadd.f32 %v175, %v264
    %266 = vdwg.mxu0
    %267 = vmatpush.bf16.msra.mxu0 0
    %268 = vmatpush.bf16.msra.mxu0 0
    %269 = vmatpush.bf16.msra.mxu0 0
    %270 = vmatpush.bf16.msra.mxu0 0
    %271 = vmatpush.bf16.msra.mxu0 0
    %272 = vmatpush.bf16.msra.mxu0 0
    %273 = vmatpush.bf16.msra.mxu0 %v212
    %274 = vmatpush.bf16.msra.mxu0 %v208
    %275 = vmatmul.bf16.gmra.mxu0 %v223
    %v276 = vpop.f32.mrf.mxu0
    %v277 = vadd.f32 %v176, %v276
    %v278 = vpop.f32.mrf.mxu0
    %v279 = vadd.f32 %v176, %v278
    %280 = vdwg.mxu0
    %v281 = vmax.f32 %v235, 0.0
    %v282 = vmax.f32 %v249, 0.0
    %v283 = vmax.f32 %v263, 0.0
    %v284 = vmax.f32 %v277, 0.0
    %v285 = vmax.f32 %v237, 0.0
    %v286 = vmax.f32 %v251, 0.0
    %v287 = vmax.f32 %v265, 0.0
    %v288 = vmax.f32 %v279, 0.0
    %v289 = vpack.c.bf16 %v285, %v281
    %v290 = vpack.c.bf16 %v286, %v282
    %v291 = vpack.c.bf16 %v287, %v283
    %v292 = vpack.c.bf16 %v288, %v284
    %v293 = vld [vmem:[#allocation7] sm:$0xff]
    %v294 = vld [vmem:[#allocation7 + $0x8] sm:$0xff]
    %v295 = vld [vmem:[#allocation7 + $0x10] sm:$0xff]
    %v296 = vld [vmem:[#allocation7 + $0x18] sm:$0xff]
    %v297 = vld [vmem:[#allocation7 + $0x20] sm:$0xff]
    %v298 = vld [vmem:[#allocation7 + $0x28] sm:$0xff]
    %v299 = vld [vmem:[#allocation7 + $0x30] sm:$0xff]
    %v300 = vld [vmem:[#allocation7 + $0x38] sm:$0xff]
    %v301 = vld [vmem:[#allocation7 + $0x40] sm:$0xff]
    %v302 = vld [vmem:[#allocation7 + $0x48] sm:$0xff]
    %v303 = vld [vmem:[#allocation7 + $0x50] sm:$0xff]
    %v304 = vld [vmem:[#allocation7 + $0x58] sm:$0xff]
    %v305 = vld [vmem:[#allocation7 + $0x60] sm:$0xff]
    %v306 = vld [vmem:[#allocation7 + $0x68] sm:$0xff]
    %v307 = vld [vmem:[#allocation7 + $0x70] sm:$0xff]
    %v308 = vld [vmem:[#allocation7 + $0x78] sm:$0xff]
    %v309 = vld [vmem:[#allocation7 + $0x80] sm:$0xff]
    %v310 = vld [vmem:[#allocation7 + $0x88] sm:$0xff]
    %v311 = vld [vmem:[#allocation7 + $0x90] sm:$0xff]
    %v312 = vld [vmem:[#allocation7 + $0x98] sm:$0xff]
    %v313 = vld [vmem:[#allocation7 + $0xa0] sm:$0xff]
    %v314 = vld [vmem:[#allocation7 + $0xa8] sm:$0xff]
    %v315 = vld [vmem:[#allocation7 + $0xb0] sm:$0xff]
    %v316 = vld [vmem:[#allocation7 + $0xb8] sm:$0xff]
    %v317 = vld [vmem:[#allocation7 + $0xc0] sm:$0xff]
    %v318 = vld [vmem:[#allocation7 + $0xc8] sm:$0xff]
    %v319 = vld [vmem:[#allocation7 + $0xd0] sm:$0xff]
    %v320 = vld [vmem:[#allocation7 + $0xd8] sm:$0xff]
    %v321 = vld [vmem:[#allocation7 + $0xe0] sm:$0xff]
    %v322 = vld [vmem:[#allocation7 + $0xe8] sm:$0xff]
    %v323 = vld [vmem:[#allocation7 + $0xf0] sm:$0xff]
    %v324 = vld [vmem:[#allocation7 + $0xf8] sm:$0xff]
    %v325 = vld [vmem:[#allocation7 + $0x100] sm:$0xff]
    %v326 = vld [vmem:[#allocation7 + $0x108] sm:$0xff]
    %v327 = vld [vmem:[#allocation7 + $0x110] sm:$0xff]
    %v328 = vld [vmem:[#allocation7 + $0x118] sm:$0xff]
    %v329 = vld [vmem:[#allocation7 + $0x120] sm:$0xff]
    %v330 = vld [vmem:[#allocation7 + $0x128] sm:$0xff]
    %v331 = vld [vmem:[#allocation7 + $0x130] sm:$0xff]
    %v332 = vld [vmem:[#allocation7 + $0x138] sm:$0xff]
    %v333 = vld [vmem:[#allocation7 + $0x140] sm:$0xff]
    %v334 = vld [vmem:[#allocation7 + $0x148] sm:$0xff]
    %v335 = vld [vmem:[#allocation7 + $0x150] sm:$0xff]
    %v336 = vld [vmem:[#allocation7 + $0x158] sm:$0xff]
    %v337 = vld [vmem:[#allocation7 + $0x160] sm:$0xff]
    %v338 = vld [vmem:[#allocation7 + $0x168] sm:$0xff]
    %v339 = vld [vmem:[#allocation7 + $0x170] sm:$0xff]
    %v340 = vld [vmem:[#allocation7 + $0x178] sm:$0xff]
    %v341 = vld [vmem:[#allocation7 + $0x180] sm:$0xff]
    %v342 = vld [vmem:[#allocation7 + $0x188] sm:$0xff]
    %v343 = vld [vmem:[#allocation7 + $0x190] sm:$0xff]
    %v344 = vld [vmem:[#allocation7 + $0x198] sm:$0xff]
    %v345 = vld [vmem:[#allocation7 + $0x1a0] sm:$0xff]
    %v346 = vld [vmem:[#allocation7 + $0x1a8] sm:$0xff]
    %v347 = vld [vmem:[#allocation7 + $0x1b0] sm:$0xff]
    %v348 = vld [vmem:[#allocation7 + $0x1b8] sm:$0xff]
    %v349 = vld [vmem:[#allocation7 + $0x1c0] sm:$0xff]
    %v350 = vld [vmem:[#allocation7 + $0x1c8] sm:$0xff]
    %v351 = vld [vmem:[#allocation7 + $0x1d0] sm:$0xff]
    %v352 = vld [vmem:[#allocation7 + $0x1d8] sm:$0xff]
    %v353 = vld [vmem:[#allocation7 + $0x1e0] sm:$0xff]
    %v354 = vld [vmem:[#allocation7 + $0x1e8] sm:$0xff]
    %v355 = vld [vmem:[#allocation7 + $0x1f0] sm:$0xff]
    %v356 = vld [vmem:[#allocation7 + $0x1f8] sm:$0xff]
    %v357 = vld [vmem:[#allocation9] sm:$0x3]
    %v359 = vperm.slane %v357, 0
    %v360 = vperm.slane %v357, 1
    %v427 = vunpack.c.l.b16 %v293
    %v428 = vunpack.c.h.b16 %v293
    %v429 = vunpack.c.l.b16 %v294
    %v430 = vunpack.c.h.b16 %v294
    %v431 = vunpack.c.l.b16 %v295
    %v432 = vunpack.c.h.b16 %v295
    %v433 = vunpack.c.l.b16 %v296
    %v434 = vunpack.c.h.b16 %v296
    %v435 = vunpack.c.l.b16 %v297
    %v436 = vunpack.c.h.b16 %v297
    %v437 = vunpack.c.l.b16 %v298
    %v438 = vunpack.c.h.b16 %v298
    %v439 = vunpack.c.l.b16 %v299
    %v440 = vunpack.c.h.b16 %v299
    %v441 = vunpack.c.l.b16 %v300
    %v442 = vunpack.c.h.b16 %v300
    %v443 = vunpack.c.l.b16 %v301
    %v444 = vunpack.c.h.b16 %v301
    %v445 = vunpack.c.l.b16 %v302
    %v446 = vunpack.c.h.b16 %v302
    %v447 = vunpack.c.l.b16 %v303
    %v448 = vunpack.c.h.b16 %v303
    %v449 = vunpack.c.l.b16 %v304
    %v450 = vunpack.c.h.b16 %v304
    %v451 = vunpack.c.l.b16 %v305
    %v452 = vunpack.c.h.b16 %v305
    %v453 = vunpack.c.l.b16 %v306
    %v454 = vunpack.c.h.b16 %v306
    %v455 = vunpack.c.l.b16 %v307
    %v456 = vunpack.c.h.b16 %v307
    %v457 = vunpack.c.l.b16 %v308
    %v458 = vunpack.c.h.b16 %v308
    %v459 = vunpack.c.l.b16 %v309
    %v460 = vunpack.c.h.b16 %v309
    %v461 = vunpack.c.l.b16 %v310
    %v462 = vunpack.c.h.b16 %v310
    %v463 = vunpack.c.l.b16 %v311
    %v464 = vunpack.c.h.b16 %v311
    %v465 = vunpack.c.l.b16 %v312
    %v466 = vunpack.c.h.b16 %v312
    %v467 = vunpack.c.l.b16 %v313
    %v468 = vunpack.c.h.b16 %v313
    %v469 = vunpack.c.l.b16 %v314
    %v470 = vunpack.c.h.b16 %v314
    %v471 = vunpack.c.l.b16 %v315
    %v472 = vunpack.c.h.b16 %v315
    %v473 = vunpack.c.l.b16 %v316
    %v474 = vunpack.c.h.b16 %v316
    %v475 = vunpack.c.l.b16 %v317
    %v476 = vunpack.c.h.b16 %v317
    %v477 = vunpack.c.l.b16 %v318
    %v478 = vunpack.c.h.b16 %v318
    %v479 = vunpack.c.l.b16 %v319
    %v480 = vunpack.c.h.b16 %v319
    %v481 = vunpack.c.l.b16 %v320
    %v482 = vunpack.c.h.b16 %v320
    %v483 = vunpack.c.l.b16 %v321
    %v484 = vunpack.c.h.b16 %v321
    %v485 = vunpack.c.l.b16 %v322
    %v486 = vunpack.c.h.b16 %v322
    %v487 = vunpack.c.l.b16 %v323
    %v488 = vunpack.c.h.b16 %v323
    %v489 = vunpack.c.l.b16 %v324
    %v490 = vunpack.c.h.b16 %v324
    %v491 = vunpack.c.l.b16 %v325
    %v492 = vunpack.c.h.b16 %v325
    %v493 = vunpack.c.l.b16 %v326
    %v494 = vunpack.c.h.b16 %v326
    %v495 = vunpack.c.l.b16 %v327
    %v496 = vunpack.c.h.b16 %v327
    %v497 = vunpack.c.l.b16 %v328
    %v498 = vunpack.c.h.b16 %v328
    %v499 = vunpack.c.l.b16 %v329
    %v500 = vunpack.c.h.b16 %v329
    %v501 = vunpack.c.l.b16 %v330
    %v502 = vunpack.c.h.b16 %v330
    %v503 = vunpack.c.l.b16 %v331
    %v504 = vunpack.c.h.b16 %v331
    %v505 = vunpack.c.l.b16 %v332
    %v506 = vunpack.c.h.b16 %v332
    %v507 = vunpack.c.l.b16 %v333
    %v508 = vunpack.c.h.b16 %v333
    %v509 = vunpack.c.l.b16 %v334
    %v510 = vunpack.c.h.b16 %v334
    %v511 = vunpack.c.l.b16 %v335
    %v512 = vunpack.c.h.b16 %v335
    %v513 = vunpack.c.l.b16 %v336
    %v514 = vunpack.c.h.b16 %v336
    %v515 = vunpack.c.l.b16 %v337
    %v516 = vunpack.c.h.b16 %v337
    %v517 = vunpack.c.l.b16 %v338
    %v518 = vunpack.c.h.b16 %v338
    %v519 = vunpack.c.l.b16 %v339
    %v520 = vunpack.c.h.b16 %v339
    %v521 = vunpack.c.l.b16 %v340
    %v522 = vunpack.c.h.b16 %v340
    %v523 = vunpack.c.l.b16 %v341
    %v524 = vunpack.c.h.b16 %v341
    %v525 = vunpack.c.l.b16 %v342
    %v526 = vunpack.c.h.b16 %v342
    %v527 = vunpack.c.l.b16 %v343
    %v528 = vunpack.c.h.b16 %v343
    %v529 = vunpack.c.l.b16 %v344
    %v530 = vunpack.c.h.b16 %v344
    %v531 = vunpack.c.l.b16 %v345
    %v532 = vunpack.c.h.b16 %v345
    %v533 = vunpack.c.l.b16 %v346
    %v534 = vunpack.c.h.b16 %v346
    %v535 = vunpack.c.l.b16 %v347
    %v536 = vunpack.c.h.b16 %v347
    %v537 = vunpack.c.l.b16 %v348
    %v538 = vunpack.c.h.b16 %v348
    %v539 = vunpack.c.l.b16 %v349
    %v540 = vunpack.c.h.b16 %v349
    %v541 = vunpack.c.l.b16 %v350
    %v542 = vunpack.c.h.b16 %v350
    %v543 = vunpack.c.l.b16 %v351
    %v544 = vunpack.c.h.b16 %v351
    %v545 = vunpack.c.l.b16 %v352
    %v546 = vunpack.c.h.b16 %v352
    %v547 = vunpack.c.l.b16 %v353
    %v548 = vunpack.c.h.b16 %v353
    %v549 = vunpack.c.l.b16 %v354
    %v550 = vunpack.c.h.b16 %v354
    %v551 = vunpack.c.l.b16 %v355
    %v552 = vunpack.c.h.b16 %v355
    %v553 = vunpack.c.l.b16 %v356
    %v554 = vunpack.c.h.b16 %v356
    %v555 = vpack.c.b16 %v429, %v427
    %v556 = vpack.c.b16 %v430, %v428
    %v557 = vpack.c.b16 %v433, %v431
    %v558 = vpack.c.b16 %v434, %v432
    %v559 = vpack.c.b16 %v437, %v435
    %v560 = vpack.c.b16 %v438, %v436
    %v561 = vpack.c.b16 %v441, %v439
    %v562 = vpack.c.b16 %v442, %v440
    %v563 = vpack.c.b16 %v445, %v443
    %v564 = vpack.c.b16 %v446, %v444
    %v565 = vpack.c.b16 %v449, %v447
    %v566 = vpack.c.b16 %v450, %v448
    %v567 = vpack.c.b16 %v453, %v451
    %v568 = vpack.c.b16 %v454, %v452
    %v569 = vpack.c.b16 %v457, %v455
    %v570 = vpack.c.b16 %v458, %v456
    %v571 = vpack.c.b16 %v461, %v459
    %v572 = vpack.c.b16 %v462, %v460
    %v573 = vpack.c.b16 %v465, %v463
    %v574 = vpack.c.b16 %v466, %v464
    %v575 = vpack.c.b16 %v469, %v467
    %v576 = vpack.c.b16 %v470, %v468
    %v577 = vpack.c.b16 %v473, %v471
    %v578 = vpack.c.b16 %v474, %v472
    %v579 = vpack.c.b16 %v477, %v475
    %v580 = vpack.c.b16 %v478, %v476
    %v581 = vpack.c.b16 %v481, %v479
    %v582 = vpack.c.b16 %v482, %v480
    %v583 = vpack.c.b16 %v485, %v483
    %v584 = vpack.c.b16 %v486, %v484
    %v585 = vpack.c.b16 %v489, %v487
    %v586 = vpack.c.b16 %v490, %v488
    %v587 = vpack.c.b16 %v493, %v491
    %v588 = vpack.c.b16 %v494, %v492
    %v589 = vpack.c.b16 %v497, %v495
    %v590 = vpack.c.b16 %v498, %v496
    %v591 = vpack.c.b16 %v501, %v499
    %v592 = vpack.c.b16 %v502, %v500
    %v593 = vpack.c.b16 %v505, %v503
    %v594 = vpack.c.b16 %v506, %v504
    %v595 = vpack.c.b16 %v509, %v507
    %v596 = vpack.c.b16 %v510, %v508
    %v597 = vpack.c.b16 %v513, %v511
    %v598 = vpack.c.b16 %v514, %v512
    %v599 = vpack.c.b16 %v517, %v515
    %v600 = vpack.c.b16 %v518, %v516
    %v601 = vpack.c.b16 %v521, %v519
    %v602 = vpack.c.b16 %v522, %v520
    %v603 = vpack.c.b16 %v525, %v523
    %v604 = vpack.c.b16 %v526, %v524
    %v605 = vpack.c.b16 %v529, %v527
    %v606 = vpack.c.b16 %v530, %v528
    %v607 = vpack.c.b16 %v533, %v531
    %v608 = vpack.c.b16 %v534, %v532
    %v609 = vpack.c.b16 %v537, %v535
    %v610 = vpack.c.b16 %v538, %v536
    %v611 = vpack.c.b16 %v541, %v539
    %v612 = vpack.c.b16 %v542, %v540
    %v613 = vpack.c.b16 %v545, %v543
    %v614 = vpack.c.b16 %v546, %v544
    %v615 = vpack.c.b16 %v549, %v547
    %v616 = vpack.c.b16 %v550, %v548
    %v617 = vpack.c.b16 %v553, %v551
    %v618 = vpack.c.b16 %v554, %v552
    %683 = vmatpush.bf16.msra.mxu0 %v569
    %684 = vmatpush.bf16.msra.mxu0 %v567
    %685 = vmatpush.bf16.msra.mxu0 %v565
    %686 = vmatpush.bf16.msra.mxu0 %v563
    %687 = vmatpush.bf16.msra.mxu0 %v561
    %688 = vmatpush.bf16.msra.mxu0 %v559
    %689 = vmatpush.bf16.msra.mxu0 %v557
    %690 = vmatpush.bf16.msra.mxu0 %v555
    %691 = vmatmul.bf16.gmra.mxu0 %v289
    %v692 = vpop.f32.mrf.mxu0
    %v693 = vadd.f32 %v359, %v692
    %v694 = vpop.f32.mrf.mxu0
    %v695 = vadd.f32 %v359, %v694
    %696 = vdwg.mxu0
    %697 = vmatpush.bf16.msra.mxu0 %v585
    %698 = vmatpush.bf16.msra.mxu0 %v583
    %699 = vmatpush.bf16.msra.mxu0 %v581
    %700 = vmatpush.bf16.msra.mxu0 %v579
    %701 = vmatpush.bf16.msra.mxu0 %v577
    %702 = vmatpush.bf16.msra.mxu0 %v575
    %703 = vmatpush.bf16.msra.mxu0 %v573
    %704 = vmatpush.bf16.msra.mxu0 %v571
    %705 = vmatmul.bf16.gmra.mxu0 %v290
    %v706 = vpop.f32.mrf.mxu0
    %v707 = vadd.f32 %v693, %v706
    %v708 = vpop.f32.mrf.mxu0
    %v709 = vadd.f32 %v695, %v708
    %710 = vdwg.mxu0
    %711 = vmatpush.bf16.msra.mxu0 %v601
    %712 = vmatpush.bf16.msra.mxu0 %v599
    %713 = vmatpush.bf16.msra.mxu0 %v597
    %714 = vmatpush.bf16.msra.mxu0 %v595
    %715 = vmatpush.bf16.msra.mxu0 %v593
    %716 = vmatpush.bf16.msra.mxu0 %v591
    %717 = vmatpush.bf16.msra.mxu0 %v589
    %718 = vmatpush.bf16.msra.mxu0 %v587
    %719 = vmatmul.bf16.gmra.mxu0 %v291
    %v720 = vpop.f32.mrf.mxu0
    %v721 = vadd.f32 %v707, %v720
    %v722 = vpop.f32.mrf.mxu0
    %v723 = vadd.f32 %v709, %v722
    %724 = vdwg.mxu0
    %725 = vmatpush.bf16.msra.mxu0 %v617
    %726 = vmatpush.bf16.msra.mxu0 %v615
    %727 = vmatpush.bf16.msra.mxu0 %v613
    %728 = vmatpush.bf16.msra.mxu0 %v611
    %729 = vmatpush.bf16.msra.mxu0 %v609
    %730 = vmatpush.bf16.msra.mxu0 %v607
    %731 = vmatpush.bf16.msra.mxu0 %v605
    %732 = vmatpush.bf16.msra.mxu0 %v603
    %733 = vmatmul.bf16.gmra.mxu0 %v292
    %v734 = vpop.f32.mrf.mxu0
    %v735 = vadd.f32 %v721, %v734
    %v736 = vpop.f32.mrf.mxu0
    %v737 = vadd.f32 %v723, %v736
    %738 = vdwg.mxu0
    %739 = vmatpush.bf16.msra.mxu0 %v570
    %740 = vmatpush.bf16.msra.mxu0 %v568
    %741 = vmatpush.bf16.msra.mxu0 %v566
    %742 = vmatpush.bf16.msra.mxu0 %v564
    %743 = vmatpush.bf16.msra.mxu0 %v562
    %744 = vmatpush.bf16.msra.mxu0 %v560
    %745 = vmatpush.bf16.msra.mxu0 %v558
    %746 = vmatpush.bf16.msra.mxu0 %v556
    %747 = vmatmul.bf16.gmra.mxu0 %v289
    %v748 = vpop.f32.mrf.mxu0
    %v749 = vadd.f32 %v360, %v748
    %v750 = vpop.f32.mrf.mxu0
    %v751 = vadd.f32 %v360, %v750
    %752 = vdwg.mxu0
    %753 = vmatpush.bf16.msra.mxu0 %v586
    %754 = vmatpush.bf16.msra.mxu0 %v584
    %755 = vmatpush.bf16.msra.mxu0 %v582
    %756 = vmatpush.bf16.msra.mxu0 %v580
    %757 = vmatpush.bf16.msra.mxu0 %v578
    %758 = vmatpush.bf16.msra.mxu0 %v576
    %759 = vmatpush.bf16.msra.mxu0 %v574
    %760 = vmatpush.bf16.msra.mxu0 %v572
    %761 = vmatmul.bf16.gmra.mxu0 %v290
    %v762 = vpop.f32.mrf.mxu0
    %v763 = vadd.f32 %v749, %v762
    %v764 = vpop.f32.mrf.mxu0
    %v765 = vadd.f32 %v751, %v764
    %766 = vdwg.mxu0
    %767 = vmatpush.bf16.msra.mxu0 %v602
    %768 = vmatpush.bf16.msra.mxu0 %v600
    %769 = vmatpush.bf16.msra.mxu0 %v598
    %770 = vmatpush.bf16.msra.mxu0 %v596
    %771 = vmatpush.bf16.msra.mxu0 %v594
    %772 = vmatpush.bf16.msra.mxu0 %v592
    %773 = vmatpush.bf16.msra.mxu0 %v590
    %774 = vmatpush.bf16.msra.mxu0 %v588
    %775 = vmatmul.bf16.gmra.mxu0 %v291
    %v776 = vpop.f32.mrf.mxu0
    %v777 = vadd.f32 %v763, %v776
    %v778 = vpop.f32.mrf.mxu0
    %v779 = vadd.f32 %v765, %v778
    %780 = vdwg.mxu0
    %781 = vmatpush.bf16.msra.mxu0 %v618
    %782 = vmatpush.bf16.msra.mxu0 %v616
    %783 = vmatpush.bf16.msra.mxu0 %v614
    %784 = vmatpush.bf16.msra.mxu0 %v612
    %785 = vmatpush.bf16.msra.mxu0 %v610
    %786 = vmatpush.bf16.msra.mxu0 %v608
    %787 = vmatpush.bf16.msra.mxu0 %v606
    %788 = vmatpush.bf16.msra.mxu0 %v604
    %789 = vmatmul.bf16.gmra.mxu0 %v292
    %v790 = vpop.f32.mrf.mxu0
    %v791 = vadd.f32 %v777, %v790
    %v792 = vpop.f32.mrf.mxu0
    %v793 = vadd.f32 %v779, %v792
    %794 = vdwg.mxu0
    %v795 = vmax.f32 %v735, 0.0
    %v796 = vmax.f32 %v791, 0.0
    %v797 = vmax.f32 %v737, 0.0
    %v798 = vmax.f32 %v793, 0.0
    %v799 = vpack.c.bf16 %v797, %v795
    %v800 = vpack.c.bf16 %v798, %v796
    %v801 = vld [vmem:[#allocation10] sm:$0xf]
    %v802 = vld [vmem:[#allocation10 + $0x4] sm:$0xf]
    %v803 = vld [vmem:[#allocation10 + $0x8] sm:$0xf]
    %v804 = vld [vmem:[#allocation10 + $0xc] sm:$0xf]
    %v805 = vld [vmem:[#allocation10 + $0x10] sm:$0xf]
    %v806 = vld [vmem:[#allocation10 + $0x14] sm:$0xf]
    %v807 = vld [vmem:[#allocation10 + $0x18] sm:$0xf]
    %v808 = vld [vmem:[#allocation10 + $0x1c] sm:$0xf]
    %v809 = vld [vmem:[#allocation10 + $0x20] sm:$0xf]
    %v810 = vld [vmem:[#allocation10 + $0x24] sm:$0xf]
    %v811 = vld [vmem:[#allocation10 + $0x28] sm:$0xf]
    %v812 = vld [vmem:[#allocation10 + $0x2c] sm:$0xf]
    %v813 = vld [vmem:[#allocation10 + $0x30] sm:$0xf]
    %v814 = vld [vmem:[#allocation10 + $0x34] sm:$0xf]
    %v815 = vld [vmem:[#allocation10 + $0x38] sm:$0xf]
    %v816 = vld [vmem:[#allocation10 + $0x3c] sm:$0xf]
    %v817 = vld [vmem:[#allocation10 + $0x40] sm:$0xf]
    %v818 = vld [vmem:[#allocation10 + $0x44] sm:$0xf]
    %v819 = vld [vmem:[#allocation10 + $0x48] sm:$0xf]
    %v820 = vld [vmem:[#allocation10 + $0x4c] sm:$0xf]
    %v821 = vld [vmem:[#allocation10 + $0x50] sm:$0xf]
    %v822 = vld [vmem:[#allocation10 + $0x54] sm:$0xf]
    %v823 = vld [vmem:[#allocation10 + $0x58] sm:$0xf]
    %v824 = vld [vmem:[#allocation10 + $0x5c] sm:$0xf]
    %v825 = vld [vmem:[#allocation10 + $0x60] sm:$0xf]
    %v826 = vld [vmem:[#allocation10 + $0x64] sm:$0xf]
    %v827 = vld [vmem:[#allocation10 + $0x68] sm:$0xf]
    %v828 = vld [vmem:[#allocation10 + $0x6c] sm:$0xf]
    %v829 = vld [vmem:[#allocation10 + $0x70] sm:$0xf]
    %v830 = vld [vmem:[#allocation10 + $0x74] sm:$0xf]
    %v831 = vld [vmem:[#allocation10 + $0x78] sm:$0xf]
    %v832 = vld [vmem:[#allocation10 + $0x7c] sm:$0xf]
    %v833 = vld [vmem:[%s6] sm:$0x1]
    %v835 = vperm.slane %v833, 0
    %v869 = vunpack.c.l.b16 %v801
    %v870 = vunpack.c.l.b16 %v802
    %v871 = vunpack.c.l.b16 %v803
    %v872 = vunpack.c.l.b16 %v804
    %v873 = vunpack.c.l.b16 %v805
    %v874 = vunpack.c.l.b16 %v806
    %v875 = vunpack.c.l.b16 %v807
    %v876 = vunpack.c.l.b16 %v808
    %v877 = vunpack.c.l.b16 %v809
    %v878 = vunpack.c.l.b16 %v810
    %v879 = vunpack.c.l.b16 %v811
    %v880 = vunpack.c.l.b16 %v812
    %v881 = vunpack.c.l.b16 %v813
    %v882 = vunpack.c.l.b16 %v814
    %v883 = vunpack.c.l.b16 %v815
    %v884 = vunpack.c.l.b16 %v816
    %v885 = vunpack.c.l.b16 %v817
    %v886 = vunpack.c.l.b16 %v818
    %v887 = vunpack.c.l.b16 %v819
    %v888 = vunpack.c.l.b16 %v820
    %v889 = vunpack.c.l.b16 %v821
    %v890 = vunpack.c.l.b16 %v822
    %v891 = vunpack.c.l.b16 %v823
    %v892 = vunpack.c.l.b16 %v824
    %v893 = vunpack.c.l.b16 %v825
    %v894 = vunpack.c.l.b16 %v826
    %v895 = vunpack.c.l.b16 %v827
    %v896 = vunpack.c.l.b16 %v828
    %v897 = vunpack.c.l.b16 %v829
    %v898 = vunpack.c.l.b16 %v830
    %v899 = vunpack.c.l.b16 %v831
    %v900 = vunpack.c.l.b16 %v832
    %v901 = vpack.c.b16 %v870, %v869
    %v902 = vpack.c.b16 %v872, %v871
    %v903 = vpack.c.b16 %v874, %v873
    %v904 = vpack.c.b16 %v876, %v875
    %v905 = vpack.c.b16 %v878, %v877
    %v906 = vpack.c.b16 %v880, %v879
    %v907 = vpack.c.b16 %v882, %v881
    %v908 = vpack.c.b16 %v884, %v883
    %v909 = vpack.c.b16 %v886, %v885
    %v910 = vpack.c.b16 %v888, %v887
    %v911 = vpack.c.b16 %v890, %v889
    %v912 = vpack.c.b16 %v892, %v891
    %v913 = vpack.c.b16 %v894, %v893
    %v914 = vpack.c.b16 %v896, %v895
    %v915 = vpack.c.b16 %v898, %v897
    %v916 = vpack.c.b16 %v900, %v899
    %933 = vmatpush.bf16.msra.mxu0 %v908
    %934 = vmatpush.bf16.msra.mxu0 %v907
    %935 = vmatpush.bf16.msra.mxu0 %v906
    %936 = vmatpush.bf16.msra.mxu0 %v905
    %937 = vmatpush.bf16.msra.mxu0 %v904
    %938 = vmatpush.bf16.msra.mxu0 %v903
    %939 = vmatpush.bf16.msra.mxu0 %v902
    %940 = vmatpush.bf16.msra.mxu0 %v901
    %941 = vmatmul.bf16.gmra.mxu0 %v799
    %v942 = vpop.f32.mrf.mxu0
    %v943 = vadd.f32 %v835, %v942
    %v944 = vpop.f32.mrf.mxu0
    %v945 = vadd.f32 %v835, %v944
    %946 = vdwg.mxu0
    %947 = vmatpush.bf16.msra.mxu0 %v916
    %948 = vmatpush.bf16.msra.mxu0 %v915
    %949 = vmatpush.bf16.msra.mxu0 %v914
    %950 = vmatpush.bf16.msra.mxu0 %v913
    %951 = vmatpush.bf16.msra.mxu0 %v912
    %952 = vmatpush.bf16.msra.mxu0 %v911
    %953 = vmatpush.bf16.msra.mxu0 %v910
    %954 = vmatpush.bf16.msra.mxu0 %v909
    %955 = vmatmul.bf16.gmra.mxu0 %v800
    %v956 = vpop.f32.mrf.mxu0
    %v957 = vadd.f32 %v943, %v956
    %v958 = vpop.f32.mrf.mxu0
    %v959 = vadd.f32 %v945, %v958
    %960 = vdwg.mxu0
    %v961 = vmax.f32 %v957, 0.0
    %v962 = vmax.f32 %v959, 0.0
    %v963 = vpack.c.bf16 %v962, %v961
    %v964 = vld [vmem:[#allocation12] sm:$0xf]
    %v965 = vld [vmem:[#allocation12 + $0x4] sm:$0xf]
    %v966 = vld [vmem:[#allocation12 + $0x8] sm:$0xf]
    %v967 = vld [vmem:[#allocation12 + $0xc] sm:$0xf]
    %v968 = vld [vmem:[#allocation12 + $0x10] sm:$0xf]
    %v969 = vld [vmem:[#allocation12 + $0x14] sm:$0xf]
    %v970 = vld [vmem:[#allocation12 + $0x18] sm:$0xf]
    %v971 = vld [vmem:[#allocation12 + $0x1c] sm:$0xf]
    %v972 = vld [vmem:[#allocation12 + $0x20] sm:$0xf]
    %v973 = vld [vmem:[#allocation12 + $0x24] sm:$0xf]
    %v974 = vld [vmem:[#allocation12 + $0x28] sm:$0xf]
    %v975 = vld [vmem:[#allocation12 + $0x2c] sm:$0xf]
    %v976 = vld [vmem:[#allocation12 + $0x30] sm:$0xf]
    %v977 = vld [vmem:[#allocation12 + $0x34] sm:$0xf]
    %v978 = vld [vmem:[#allocation12 + $0x38] sm:$0xf]
    %v979 = vld [vmem:[#allocation12 + $0x3c] sm:$0xf]
    %v980 = vld [vmem:[%s8] sm:$0x1]
    %v982 = vperm.slane %v980, 0
    %v1000 = vunpack.c.l.b16 %v964
    %v1001 = vunpack.c.l.b16 %v965
    %v1002 = vunpack.c.l.b16 %v966
    %v1003 = vunpack.c.l.b16 %v967
    %v1004 = vunpack.c.l.b16 %v968
    %v1005 = vunpack.c.l.b16 %v969
    %v1006 = vunpack.c.l.b16 %v970
    %v1007 = vunpack.c.l.b16 %v971
    %v1008 = vunpack.c.l.b16 %v972
    %v1009 = vunpack.c.l.b16 %v973
    %v1010 = vunpack.c.l.b16 %v974
    %v1011 = vunpack.c.l.b16 %v975
    %v1012 = vunpack.c.l.b16 %v976
    %v1013 = vunpack.c.l.b16 %v977
    %v1014 = vunpack.c.l.b16 %v978
    %v1015 = vunpack.c.l.b16 %v979
    %v1016 = vpack.c.b16 %v1001, %v1000
    %v1017 = vpack.c.b16 %v1003, %v1002
    %v1018 = vpack.c.b16 %v1005, %v1004
    %v1019 = vpack.c.b16 %v1007, %v1006
    %v1020 = vpack.c.b16 %v1009, %v1008
    %v1021 = vpack.c.b16 %v1011, %v1010
    %v1022 = vpack.c.b16 %v1013, %v1012
    %v1023 = vpack.c.b16 %v1015, %v1014
    %1032 = vmatpush.bf16.msra.mxu0 %v1023
    %1033 = vmatpush.bf16.msra.mxu0 %v1022
    %1034 = vmatpush.bf16.msra.mxu0 %v1021
    %1035 = vmatpush.bf16.msra.mxu0 %v1020
    %1036 = vmatpush.bf16.msra.mxu0 %v1019
    %1037 = vmatpush.bf16.msra.mxu0 %v1018
    %1038 = vmatpush.bf16.msra.mxu0 %v1017
    %1039 = vmatpush.bf16.msra.mxu0 %v1016
    %1040 = vmatmul.bf16.gmra.mxu0 %v963
    %v1041 = vpop.f32.mrf.mxu0
    %v1042 = vadd.f32 %v982, %v1041
    %v1043 = vpop.f32.mrf.mxu0
    %v1044 = vadd.f32 %v982, %v1043
    %1045 = vdwg.mxu0
    %v1046 = vmax.f32 %v1042, 0.0
    %v1047 = vmax.f32 %v1044, 0.0
    %v1048 = vpack.c.bf16 %v1047, %v1046
    %v1049 = vld [vmem:[#allocation13] sm:$0xf]
    %v1050 = vld [vmem:[#allocation13 + $0x4] sm:$0xf]
    %v1051 = vld [vmem:[#allocation13 + $0x8] sm:$0xf]
    %v1052 = vld [vmem:[#allocation13 + $0xc] sm:$0xf]
    %v1053 = vld [vmem:[#allocation13 + $0x10] sm:$0xf]
    %v1054 = vld [vmem:[#allocation13 + $0x14] sm:$0xf]
    %v1055 = vld [vmem:[#allocation13 + $0x18] sm:$0xf]
    %v1056 = vld [vmem:[#allocation13 + $0x1c] sm:$0xf]
    %v1057 = vld [vmem:[#allocation13 + $0x20] sm:$0xf]
    %v1058 = vld [vmem:[#allocation13 + $0x24] sm:$0xf]
    %v1059 = vld [vmem:[#allocation13 + $0x28] sm:$0xf]
    %v1060 = vld [vmem:[#allocation13 + $0x2c] sm:$0xf]
    %v1061 = vld [vmem:[#allocation13 + $0x30] sm:$0xf]
    %v1062 = vld [vmem:[#allocation13 + $0x34] sm:$0xf]
    %v1063 = vld [vmem:[#allocation13 + $0x38] sm:$0xf]
    %v1064 = vld [vmem:[#allocation13 + $0x3c] sm:$0xf]
    %v1065 = vld [vmem:[%s10] sm:$0x1]
    %v1067 = vperm.slane %v1065, 0
    %v1085 = vunpack.c.l.b16 %v1049
    %v1086 = vunpack.c.l.b16 %v1050
    %v1087 = vunpack.c.l.b16 %v1051
    %v1088 = vunpack.c.l.b16 %v1052
    %v1089 = vunpack.c.l.b16 %v1053
    %v1090 = vunpack.c.l.b16 %v1054
    %v1091 = vunpack.c.l.b16 %v1055
    %v1092 = vunpack.c.l.b16 %v1056
    %v1093 = vunpack.c.l.b16 %v1057
    %v1094 = vunpack.c.l.b16 %v1058
    %v1095 = vunpack.c.l.b16 %v1059
    %v1096 = vunpack.c.l.b16 %v1060
    %v1097 = vunpack.c.l.b16 %v1061
    %v1098 = vunpack.c.l.b16 %v1062
    %v1099 = vunpack.c.l.b16 %v1063
    %v1100 = vunpack.c.l.b16 %v1064
    %v1101 = vpack.c.b16 %v1086, %v1085
    %v1102 = vpack.c.b16 %v1088, %v1087
    %v1103 = vpack.c.b16 %v1090, %v1089
    %v1104 = vpack.c.b16 %v1092, %v1091
    %v1105 = vpack.c.b16 %v1094, %v1093
    %v1106 = vpack.c.b16 %v1096, %v1095
    %v1107 = vpack.c.b16 %v1098, %v1097
    %v1108 = vpack.c.b16 %v1100, %v1099
    %1117 = vmatpush.bf16.msra.mxu0 %v1108
    %1118 = vmatpush.bf16.msra.mxu0 %v1107
    %1119 = vmatpush.bf16.msra.mxu0 %v1106
    %1120 = vmatpush.bf16.msra.mxu0 %v1105
    %1121 = vmatpush.bf16.msra.mxu0 %v1104
    %1122 = vmatpush.bf16.msra.mxu0 %v1103
    %1123 = vmatpush.bf16.msra.mxu0 %v1102
    %1124 = vmatpush.bf16.msra.mxu0 %v1101
    %1125 = vmatmul.bf16.gmra.mxu0 %v1048
    %v1126 = vpop.f32.mrf.mxu0
    %v1127 = vadd.f32 %v1067, %v1126
    %v1128 = vpop.f32.mrf.mxu0
    %v1129 = vadd.f32 %v1067, %v1128
    %1130 = vdwg.mxu0
    %1131 = vst [vmem:[#allocation15] sm:$0xff] %v1127
    %1132 = vst [vmem:[#allocation15 + $0x8] sm:$0xff] %v1129
    // Predicated region
    $region78: #{fc_network_forward.1} parent=1 // pred_check
      _
    $region79: #{fc_network_forward.1} parent=1 // pred_check_branch
      %1134 = sbr.rel (0) target = $region81
    $region80: #{fc_network_forward.1} parent=1 // pred_region
      // Predicated region
      $region82: #{fc_network_forward.1} parent=80 // pred_check
        _
      $region83: #{fc_network_forward.1} parent=80 // pred_check_branch
        %1136 = sbr.rel (0) target = $region85
      $region84: #{fc_network_forward.1} parent=80 // pred_region
        // Predicated region
        $region86: #{fc_network_forward.1} parent=84 // pred_check
          _
        $region87: #{fc_network_forward.1} parent=84 // pred_check_branch
          %1138 = sbr.rel (0) target = $region89
        $region88: #{fc_network_forward.1} parent=84 // pred_region
          // Predicated region
          $region101: #{fc_network_forward.1} parent=88 // pred_check
            _
          $region102: #{fc_network_forward.1} parent=88 // pred_check_branch
            %1154 = sbr.rel (0) target = $region104
          $region103: #{fc_network_forward.1} parent=88 // pred_region
            loop: start=0, step=1, limit=1
            $region105: #{fc_network_forward.1} parent=103 // loop_pre_header
              _
            $region106: #{fc_network_forward.1} parent=103 // loop_header
              %s1156 = sphi 0, %s1160
              %p1157 = scmp.ge.s32.totalorder %s1156, 1
              %s1161 = sphi [#allocation15], [#allocation15]
              %s1162 = sphi %s11, %s11
            $region107: #{fc_network_forward.1} parent=103 // loop_header_branch
              %1159 = sbr.rel (%p1157) target = $region111
            $region108: #{fc_network_forward.1} parent=103 // loop_body
              %v1163 = vld [vmem:[%s1161] sm:$0xff]
              %1164 = vst [vmem:[%s1162] sm:$0xff] %v1163
            $region109: #{fc_network_forward.1} parent=103 // loop_footer
              %s1160 = sadd.s32 1, %s1156
            $region110: #{fc_network_forward.1} parent=103 // loop_footer_branch
              %1155 = sbr.rel target = $region106
            $region111: #{fc_network_forward.1} parent=103 // loop_exit
              _
          $region104: #{fc_network_forward.1} parent=88 // pred_fallthru
            _
          // Predicated region
          $region112: #{fc_network_forward.1} parent=88 // pred_check
            _
          $region113: #{fc_network_forward.1} parent=88 // pred_check_branch
            %1166 = sbr.rel target = $region115
          $region114: #{fc_network_forward.1} parent=88 // pred_region
            _
          $region115: #{fc_network_forward.1} parent=88 // pred_fallthru
            _
        $region89: #{fc_network_forward.1} parent=84 // pred_fallthru
          _
        // Predicated region
        $region90: #{fc_network_forward.1} parent=84 // pred_check
          _
        $region91: #{fc_network_forward.1} parent=84 // pred_check_branch
          %1140 = sbr.rel target = $region93
        $region92: #{fc_network_forward.1} parent=84 // pred_region
          %s1142 = ssub.s32 256, 1
          loop: start=0, step=1, limit=1
          $region94: #{fc_network_forward.1} parent=92 // loop_pre_header
            _
          $region95: #{fc_network_forward.1} parent=92 // loop_header
            %s1144 = sphi 0, %s1148
            %p1145 = scmp.ge.s32.totalorder %s1144, 1
            %s1149 = sphi [#allocation15], [#allocation15]
            %s1150 = sphi %s11, %s11
          $region96: #{fc_network_forward.1} parent=92 // loop_header_branch
            %1147 = sbr.rel (%p1145) target = $region100
          $region97: #{fc_network_forward.1} parent=92 // loop_body
            %v1151 = vld [vmem:[%s1149] sm:%s1142]
            %1152 = vst [vmem:[%s1150] sm:%s1142] %v1151
          $region98: #{fc_network_forward.1} parent=92 // loop_footer
            %s1148 = sadd.s32 1, %s1144
          $region99: #{fc_network_forward.1} parent=92 // loop_footer_branch
            %1143 = sbr.rel target = $region95
          $region100: #{fc_network_forward.1} parent=92 // loop_exit
            _
        $region93: #{fc_network_forward.1} parent=84 // pred_fallthru
          _
      $region85: #{fc_network_forward.1} parent=80 // pred_fallthru
        _
      %1167 = vnop
    $region81: #{fc_network_forward.1} parent=1 // pred_fallthru
      _
    // Predicated region
    $region116: #{fc_network_forward.1} parent=1 // pred_check
      _
    $region117: #{fc_network_forward.1} parent=1 // pred_check_branch
      %1169 = sbr.rel (0) target = $region119
    $region118: #{fc_network_forward.1} parent=1 // pred_region
      _
    $region119: #{fc_network_forward.1} parent=1 // pred_fallthru
      _
    %1170 = vsyncpa [#allocation3], 1
    %1171 = vsyncpa [#allocation5], 1
    %1172 = vsyncpa [#allocation8], 1
    %1173 = vsyncpa [#allocation11], 1
    %1174 = vsyncpa [#allocation14], 1

</llo_original>
